<compile_context>
chip_gen: v6e
topology: v6e:2x2x1
jax: 0.10.0
libtpu: 0.0.40
codegen_flags: <defaults>
</compile_context>

<pallas_src>
import jax
import jax.numpy as jnp
from jax import lax
from jax.experimental import pallas as pl
from jax.experimental.pallas import tpu as pltpu

TILE_B_MAX = 4096  # max batch tile (lane axis); multiple of 256


def _round_up(x, m):
    return ((x + m - 1) // m) * m


def _choose_tile(batch):
    """Batch tile: >= 256 lanes, <= TILE_B_MAX, and aiming for num_tiles >= 2
    (megacore sharding on v7x) once the batch exceeds one tile."""
    half = -(-batch // 2)  # cdiv(batch, 2)
    return min(TILE_B_MAX, max(256, _round_up(half, 256)))


def mlp_kernel(x_ref, w1_ref, b1_ref, w2_ref, b2_ref, w3_ref, b3_ref, o_ref):
    # x_ref : (TILE_B, F) f32   -- natural torch layout (batch on sublanes)
    # w1_ref: (64, F)  bf16, b1_ref: (64, 1) f32
    # w2_ref: (32, 64) bf16, b2_ref: (32, 1) f32
    # w3_ref: (32, 1)  f32,  b3_ref: (1,)    f32 in SMEM
    # o_ref : (1, TILE_B) f32   -- lane-dense output row (batch on lanes)

    x_bf16 = x_ref[...].astype(jnp.bfloat16)

    # fc1 + ReLU: contract over features with the weights as the pushed/M operand
    # and the batch on the 128-lane axis (transposed orientation -> few MXU pushes).
    h1 = lax.dot_general(
        w1_ref[...], x_bf16,
        dimension_numbers=(((1,), (1,)), ((), ())),
        preferred_element_type=jnp.float32)                       # (64, TILE_B)
    h1 = jnp.maximum(h1 + b1_ref[...], 0.0)

    # fc2 + ReLU
    h2 = jnp.dot(w2_ref[...], h1.astype(jnp.bfloat16),
                 preferred_element_type=jnp.float32)               # (32, TILE_B)
    h2 = jnp.maximum(h2 + b2_ref[...], 0.0)

    # fc3 (output width 1): VPU broadcast-multiply + sublane reduction (MXU slot has
    # no slack; VPU/XLU do).  Result is naturally a lane-dense (1, TILE_B) row.
    o_ref[...] = jnp.sum(h2 * w3_ref[...], axis=0, keepdims=True) + b3_ref[0]


def prepare_params(w1, b1, w2, b2, w3, b3):
    """One-time parameter prep (hoisted out of the per-call path).

    Weights stay in native PyTorch (out, in) layout; fc1/fc2 weights are cast to
    bf16 for the MXU, fc3 weight and all biases stay f32.  b3 is a flat scalar
    destined for SMEM.
    """
    return dict(
        w1=w1.astype(jnp.bfloat16),                    # (64, F)
        b1=b1.reshape(-1, 1).astype(jnp.float32),      # (64, 1)
        w2=w2.astype(jnp.bfloat16),                    # (32, 64)
        b2=b2.reshape(-1, 1).astype(jnp.float32),      # (32, 1)
        w3=w3.reshape(-1, 1).astype(jnp.float32),      # (32, 1)
        b3=b3.reshape(-1).astype(jnp.float32),         # (1,)  -> SMEM scalar
    )


@jax.jit
def mlp_forward(x, params):
    """x: (B, F) float32 (torch.nn.Linear input layout). Returns (B, 1) float32."""
    B, F = x.shape

    tile_b = _choose_tile(B)
    b_pad = _round_up(B, tile_b)
    num_tiles = b_pad // tile_b
    if b_pad != B:
        # Only padding along batch; no transpose/cast pass over x in the wrapper.
        x = jnp.pad(x, ((0, b_pad - B), (0, 0)))

    out = pl.pallas_call(
        mlp_kernel,
        out_shape=jax.ShapeDtypeStruct((num_tiles, tile_b), jnp.float32),
        grid=(num_tiles,),
        in_specs=[
            # streamed activation tile in natural (batch, features) layout
            pl.BlockSpec((tile_b, F), lambda i: (i, 0)),
            # weights/biases: constant index_map -> resident in VMEM across the grid
            pl.BlockSpec((64, F), lambda i: (0, 0)),
            pl.BlockSpec((64, 1), lambda i: (0, 0)),
            pl.BlockSpec((32, 64), lambda i: (0, 0)),
            pl.BlockSpec((32, 1), lambda i: (0, 0)),
            pl.BlockSpec((32, 1), lambda i: (0, 0)),
            # fc3 bias: single scalar -> SMEM (no padded VMEM tile / DMA)
            pl.BlockSpec(memory_space=pltpu.MemorySpace.SMEM),
        ],
        # lane-dense output: one (1, tile_b) row per grid step
        out_specs=pl.BlockSpec((1, tile_b), lambda i: (i, 0)),
        compiler_params=pltpu.CompilerParams(
            dimension_semantics=("parallel",),  # megacore sharding of the batch on v7x
        ),
    )(x, params["w1"], params["b1"], params["w2"], params["b2"],
      params["w3"], params["b3"])

    # (num_tiles, tile_b) -> (b_pad, 1) -> drop batch padding.
    return out.reshape(b_pad, 1)[:B]


def _init_linear(key, out_features, in_features):
    """Deterministic init mimicking torch.nn.Linear default (uniform +-1/sqrt(fan_in))."""
    kw, kb = jax.random.split(key)
    bound = 1.0 / jnp.sqrt(jnp.float32(in_features))
    w = jax.random.uniform(kw, (out_features, in_features), jnp.float32, -bound, bound)
    b = jax.random.uniform(kb, (out_features,), jnp.float32, -bound, bound)
    return w, b


def reference_forward_f32(x, w1, b1, w2, b2, w3, b3):
    """Pure f32 reference with the original module semantics."""
    h1 = jnp.maximum(x @ w1.T + b1, 0.0)
    h2 = jnp.maximum(h1 @ w2.T + b2, 0.0)
    return h2 @ w3.T + b3


def reference_forward_mixed(x, w1, b1, w2, b2, w3, b3):
    """Reference matching the kernel's numerics (bf16 MXU operands, f32 accumulate/epilogue)."""
    xb, w1b, w2b = x.astype(jnp.bfloat16), w1.astype(jnp.bfloat16), w2.astype(jnp.bfloat16)
    h1 = jnp.maximum(jnp.dot(xb, w1b.T, preferred_element_type=jnp.float32) + b1, 0.0)
    h2 = jnp.maximum(
        jnp.dot(h1.astype(jnp.bfloat16), w2b.T, preferred_element_type=jnp.float32) + b2, 0.0)
    return h2 @ w3.T + b3


if __name__ == "__main__":
    key = jax.random.PRNGKey(0)
    k_x, k_x2, k1, k2, k3 = jax.random.split(key, 5)

    in_features = 8  # X_train.shape[1] — synthetic tabular feature count

    w1, b1 = _init_linear(k1, 64, in_features)
    w2, b2 = _init_linear(k2, 32, 64)
    w3, b3 = _init_linear(k3, 1, 32)
    params = prepare_params(w1, b1, w2, b2, w3, b3)

    # Small batch (single-tile path).
    batch = 8
    x = jax.random.normal(k_x, (batch, in_features), jnp.float32)
    out = jax.block_until_ready(mlp_forward(x, params))
    assert out.shape == (batch, 1)
    assert jnp.allclose(out, reference_forward_mixed(x, w1, b1, w2, b2, w3, b3),
                        atol=1e-2, rtol=1e-2)
    assert jnp.allclose(out, reference_forward_f32(x, w1, b1, w2, b2, w3, b3),
                        atol=1e-1, rtol=1e-1)

    # Larger batch (multi-tile path exercising padding/slicing and num_tiles >= 2).
    batch_l = 1000
    x_l = jax.random.normal(k_x2, (batch_l, in_features), jnp.float32)
    out_l = jax.block_until_ready(mlp_forward(x_l, params))
    assert out_l.shape == (batch_l, 1)
    assert jnp.allclose(out_l, reference_forward_mixed(x_l, w1, b1, w2, b2, w3, b3),
                        atol=1e-2, rtol=1e-2)
    assert jnp.allclose(out_l, reference_forward_f32(x_l, w1, b1, w2, b2, w3, b3),
                        atol=1e-1, rtol=1e-1)

    print("KERNEL_OK")
</pallas_src>

<mosaic_0001>
module attributes {stable_mosaic.version = 11 : i64} {
  func.func @mlp_kernel(%arg0: i32, %arg1: memref<256x8xf32, #tpu.memory_space<vmem>>, %arg2: memref<64x8xbf16, #tpu.memory_space<vmem>>, %arg3: memref<64x1xf32, #tpu.memory_space<vmem>>, %arg4: memref<32x64xbf16, #tpu.memory_space<vmem>>, %arg5: memref<32x1xf32, #tpu.memory_space<vmem>>, %arg6: memref<32x1xf32, #tpu.memory_space<vmem>>, %arg7: memref<1xf32, #tpu.memory_space<smem>>, %arg8: memref<1x256xf32, #tpu.memory_space<vmem>>) attributes {dimension_semantics = [#tpu.dimension_semantics<parallel>], iteration_bounds = array<i64: 1>, scalar_prefetch = 0 : i64, scratch_operands = 0 : i64, tpu.core_type = #tpu.core_type<tc>, window_params = [{transform_indices = @transform_0, window_bounds = array<i64: 256, 8>}, {pipeline_mode = #tpu.pipeline_mode<synchronous>, transform_indices = @transform_1, window_bounds = array<i64: 64, 8>}, {pipeline_mode = #tpu.pipeline_mode<synchronous>, transform_indices = @transform_2, window_bounds = array<i64: 64, 1>}, {pipeline_mode = #tpu.pipeline_mode<synchronous>, transform_indices = @transform_3, window_bounds = array<i64: 32, 64>}, {pipeline_mode = #tpu.pipeline_mode<synchronous>, transform_indices = @transform_4, window_bounds = array<i64: 32, 1>}, {pipeline_mode = #tpu.pipeline_mode<synchronous>, transform_indices = @transform_5, window_bounds = array<i64: 32, 1>}, {transform_indices = @transform_6, window_bounds = array<i64: 1>}, {transform_indices = @transform_7, window_bounds = array<i64: 1, 256>}]} {
    %c0 = arith.constant 0 : index
    %c0_0 = arith.constant 0 : index
    %0 = vector.load %arg1[%c0, %c0_0] : memref<256x8xf32, #tpu.memory_space<vmem>>, vector<256x8xf32>
    %1 = arith.truncf %0 : vector<256x8xf32> to vector<256x8xbf16>
    %c0_1 = arith.constant 0 : index
    %c0_2 = arith.constant 0 : index
    %2 = vector.load %arg2[%c0_1, %c0_2] : memref<64x8xbf16, #tpu.memory_space<vmem>>, vector<64x8xbf16>
    %cst = arith.constant dense<0.000000e+00> : vector<64x256xf32>
    %3 = tpu.matmul %2, %1, %cst {dimension_numbers = #tpu.dot_dimension_numbers<[1], [1], [0], [0], [0, 0, 1, 0], [], []>} : vector<64x8xbf16>, vector<256x8xbf16>, vector<64x256xf32> -> vector<64x256xf32>
    %c0_3 = arith.constant 0 : index
    %c0_4 = arith.constant 0 : index
    %4 = vector.load %arg3[%c0_3, %c0_4] : memref<64x1xf32, #tpu.memory_space<vmem>>, vector<64x1xf32>
    %5 = vector.broadcast %4 : vector<64x1xf32> to vector<64x256xf32>
    %6 = arith.addf %3, %5 : vector<64x256xf32>
    %cst_5 = arith.constant 0.000000e+00 : f32
    %7 = vector.broadcast %cst_5 : f32 to vector<64x256xf32>
    %8 = arith.maximumf %6, %7 : vector<64x256xf32>
    %c0_6 = arith.constant 0 : index
    %c0_7 = arith.constant 0 : index
    %9 = vector.load %arg4[%c0_6, %c0_7] : memref<32x64xbf16, #tpu.memory_space<vmem>>, vector<32x64xbf16>
    %10 = arith.truncf %8 : vector<64x256xf32> to vector<64x256xbf16>
    %cst_8 = arith.constant dense<0.000000e+00> : vector<32x256xf32>
    %11 = tpu.matmul %9, %10, %cst_8 {dimension_numbers = #tpu.dot_dimension_numbers<[1], [0], [0], [1], [0, 0, 1, 1], [], []>} : vector<32x64xbf16>, vector<64x256xbf16>, vector<32x256xf32> -> vector<32x256xf32>
    %c0_9 = arith.constant 0 : index
    %c0_10 = arith.constant 0 : index
    %12 = vector.load %arg5[%c0_9, %c0_10] : memref<32x1xf32, #tpu.memory_space<vmem>>, vector<32x1xf32>
    %13 = vector.broadcast %12 : vector<32x1xf32> to vector<32x256xf32>
    %14 = arith.addf %11, %13 : vector<32x256xf32>
    %cst_11 = arith.constant 0.000000e+00 : f32
    %15 = vector.broadcast %cst_11 : f32 to vector<32x256xf32>
    %16 = arith.maximumf %14, %15 : vector<32x256xf32>
    %c0_12 = arith.constant 0 : index
    %c0_13 = arith.constant 0 : index
    %17 = vector.load %arg6[%c0_12, %c0_13] : memref<32x1xf32, #tpu.memory_space<vmem>>, vector<32x1xf32>
    %18 = vector.broadcast %17 : vector<32x1xf32> to vector<32x256xf32>
    %19 = arith.mulf %16, %18 : vector<32x256xf32>
    %cst_14 = arith.constant dense<0.000000e+00> : vector<256xf32>
    %20 = vector.multi_reduction <add>, %19, %cst_14 [0] : vector<32x256xf32> to vector<256xf32>
    %21 = vector.shape_cast %20 : vector<256xf32> to vector<1x256xf32>
    %c0_15 = arith.constant 0 : index
    %22 = memref.load %arg7[%c0_15] : memref<1xf32, #tpu.memory_space<smem>>
    %23 = vector.broadcast %22 : f32 to vector<1x256xf32>
    %24 = arith.addf %21, %23 : vector<1x256xf32>
    %c0_16 = arith.constant 0 : index
    %c0_17 = arith.constant 0 : index
    %25 = vector.load %arg8[%c0_16, %c0_17] : memref<1x256xf32, #tpu.memory_space<vmem>>, vector<1x256xf32>
    tpu.vector_store %arg8[%c0_16, %c0_17], %24 {strides = array<i32>} : memref<1x256xf32, #tpu.memory_space<vmem>>, vector<1x256xf32>,
    return
  }
  func.func @transform_0(%arg0: i32) -> (i32, i32) {
    %c0_i32 = arith.constant 0 : i32
    %c0_i32_0 = arith.constant 0 : i32
    return %arg0, %c0_i32 : i32, i32
  }
  func.func @transform_1(%arg0: i32) -> (i32, i32) {
    %c0_i32 = arith.constant 0 : i32
    %c0_i32_0 = arith.constant 0 : i32
    %c0_i32_1 = arith.constant 0 : i32
    return %c0_i32, %c0_i32_0 : i32, i32
  }
  func.func @transform_2(%arg0: i32) -> (i32, i32) {
    %c0_i32 = arith.constant 0 : i32
    %c0_i32_0 = arith.constant 0 : i32
    %c0_i32_1 = arith.constant 0 : i32
    return %c0_i32, %c0_i32_0 : i32, i32
  }
  func.func @transform_3(%arg0: i32) -> (i32, i32) {
    %c0_i32 = arith.constant 0 : i32
    %c0_i32_0 = arith.constant 0 : i32
    %c0_i32_1 = arith.constant 0 : i32
    return %c0_i32, %c0_i32_0 : i32, i32
  }
  func.func @transform_4(%arg0: i32) -> (i32, i32) {
    %c0_i32 = arith.constant 0 : i32
    %c0_i32_0 = arith.constant 0 : i32
    %c0_i32_1 = arith.constant 0 : i32
    return %c0_i32, %c0_i32_0 : i32, i32
  }
  func.func @transform_5(%arg0: i32) -> (i32, i32) {
    %c0_i32 = arith.constant 0 : i32
    %c0_i32_0 = arith.constant 0 : i32
    %c0_i32_1 = arith.constant 0 : i32
    return %c0_i32, %c0_i32_0 : i32, i32
  }
  func.func @transform_6(%arg0: i32) -> i32 {
    %c0_i32 = arith.constant 0 : i32
    %c0_i32_0 = arith.constant 0 : i32
    return %c0_i32 : i32
  }
  func.func @transform_7(%arg0: i32) -> (i32, i32) {
    %c0_i32 = arith.constant 0 : i32
    %c0_i32_0 = arith.constant 0 : i32
    return %arg0, %c0_i32 : i32, i32
  }
}

</mosaic_0001>

<llo_original>
// kernel: mlp_forward.1
$region0: #{mlp_forward.1}
  #allocation0 [shape = 'u32[]', space=smem, size = 0x4, offset = 0x4, fixed_abs, tag = 'smem constant byte address 0x4 - core index']
  #allocation1 [shape = 'u32[144,128]{1,0:T(1,128)}', space=vmem, size = 0x12000, scoped, tag = 'internal scratch']
  #allocation2 [shape = 'f32[1]{0:T(128)S(6)}', space=smem, size = 0x200, scoped, tag = 'scoped memory for mlp_forward.1']
  %s0 = inlined_call_operand.vmem [shape: f32[256,8], index: 0, kind: input, shape index: {}]
  %s1 = inlined_call_operand.vmem [shape: bf16[64,8], index: 1, kind: input, shape index: {}]
  %s2 = inlined_call_operand.vmem [shape: f32[64,1], index: 2, kind: input, shape index: {}]
  %s3 = inlined_call_operand.vmem [shape: bf16[32,64], index: 3, kind: input, shape index: {}]
  %s4 = inlined_call_operand.vmem [shape: f32[32,1], index: 4, kind: input, shape index: {}]
  %s5 = inlined_call_operand.vmem [shape: f32[32,1], index: 5, kind: input, shape index: {}]
  %s6 = inlined_call_operand.<no memory space> [shape: f32[1], index: 6, kind: input, shape index: {}]
  %s7 = inlined_call_operand.vmem [shape: f32[1,256], index: 7, kind: output, shape index: {}]
  %s8 = sld [smem:[#allocation0]]
  $region38: #{mlp_forward.1} parent=0
    _
  %s10 = ssub.s32 1, %s8
  %s11 = scalar_select 0, %s10, %s8
  %12 = sst [smem:[#allocation2]] %s6
  // Predicated region
  $region2: #{mlp_forward.1} parent=0 // pred_check
    _
  $region3: #{mlp_forward.1} parent=0 // pred_check_branch
    %14 = sbr.rel (0) target = $region5
  $region4: #{mlp_forward.1} parent=0 // pred_region
    _
  $region5: #{mlp_forward.1} parent=0 // pred_fallthru
    _
  // Predicated region
  $region6: #{mlp_forward.1} parent=0 // pred_check
    _
  $region7: #{mlp_forward.1} parent=0 // pred_check_branch
    %16 = sbr.rel (0) target = $region9
  $region8: #{mlp_forward.1} parent=0 // pred_region
    _
  $region9: #{mlp_forward.1} parent=0 // pred_fallthru
    _
  // Predicated region
  $region10: #{mlp_forward.1} parent=0 // pred_check
    _
  $region11: #{mlp_forward.1} parent=0 // pred_check_branch
    %18 = sbr.rel (0) target = $region13
  $region12: #{mlp_forward.1} parent=0 // pred_region
    _
  $region13: #{mlp_forward.1} parent=0 // pred_fallthru
    _
  // Predicated region
  $region14: #{mlp_forward.1} parent=0 // pred_check
    _
  $region15: #{mlp_forward.1} parent=0 // pred_check_branch
    %20 = sbr.rel (0) target = $region17
  $region16: #{mlp_forward.1} parent=0 // pred_region
    _
  $region17: #{mlp_forward.1} parent=0 // pred_fallthru
    _
  // Predicated region
  $region18: #{mlp_forward.1} parent=0 // pred_check
    _
  $region19: #{mlp_forward.1} parent=0 // pred_check_branch
    %22 = sbr.rel (0) target = $region21
  $region20: #{mlp_forward.1} parent=0 // pred_region
    _
  $region21: #{mlp_forward.1} parent=0 // pred_fallthru
    _
  // Predicated region
  $region22: #{mlp_forward.1} parent=0 // pred_check
    _
  $region23: #{mlp_forward.1} parent=0 // pred_check_branch
    %24 = sbr.rel (0) target = $region25
  $region24: #{mlp_forward.1} parent=0 // pred_region
    _
  $region25: #{mlp_forward.1} parent=0 // pred_fallthru
    _
  // Predicated region
  $region26: #{mlp_forward.1} parent=0 // pred_check
    _
  $region27: #{mlp_forward.1} parent=0 // pred_check_branch
    %26 = sbr.rel (0) target = $region29
  $region28: #{mlp_forward.1} parent=0 // pred_region
    _
  $region29: #{mlp_forward.1} parent=0 // pred_fallthru
    _
  %v28 = vld [vmem:[%s0] sm:$0xff]
  %v29 = vld [vmem:[%s0 + $0x8] sm:$0xff]
  %v30 = vld [vmem:[%s0 + $0x10] sm:$0xff]
  %v31 = vld [vmem:[%s0 + $0x18] sm:$0xff]
  %v32 = vld [vmem:[%s0 + $0x20] sm:$0xff]
  %v33 = vld [vmem:[%s0 + $0x28] sm:$0xff]
  %v34 = vld [vmem:[%s0 + $0x30] sm:$0xff]
  %v35 = vld [vmem:[%s0 + $0x38] sm:$0xff]
  %v36 = vld [vmem:[%s0 + $0x40] sm:$0xff]
  %v37 = vld [vmem:[%s0 + $0x48] sm:$0xff]
  %v38 = vld [vmem:[%s0 + $0x50] sm:$0xff]
  %v39 = vld [vmem:[%s0 + $0x58] sm:$0xff]
  %v40 = vld [vmem:[%s0 + $0x60] sm:$0xff]
  %v41 = vld [vmem:[%s0 + $0x68] sm:$0xff]
  %v42 = vld [vmem:[%s0 + $0x70] sm:$0xff]
  %v43 = vld [vmem:[%s0 + $0x78] sm:$0xff]
  %v44 = vld [vmem:[%s0 + $0x80] sm:$0xff]
  %v45 = vld [vmem:[%s0 + $0x88] sm:$0xff]
  %v46 = vld [vmem:[%s0 + $0x90] sm:$0xff]
  %v47 = vld [vmem:[%s0 + $0x98] sm:$0xff]
  %v48 = vld [vmem:[%s0 + $0xa0] sm:$0xff]
  %v49 = vld [vmem:[%s0 + $0xa8] sm:$0xff]
  %v50 = vld [vmem:[%s0 + $0xb0] sm:$0xff]
  %v51 = vld [vmem:[%s0 + $0xb8] sm:$0xff]
  %v52 = vld [vmem:[%s0 + $0xc0] sm:$0xff]
  %v53 = vld [vmem:[%s0 + $0xc8] sm:$0xff]
  %v54 = vld [vmem:[%s0 + $0xd0] sm:$0xff]
  %v55 = vld [vmem:[%s0 + $0xd8] sm:$0xff]
  %v56 = vld [vmem:[%s0 + $0xe0] sm:$0xff]
  %v57 = vld [vmem:[%s0 + $0xe8] sm:$0xff]
  %v58 = vld [vmem:[%s0 + $0xf0] sm:$0xff]
  %v59 = vld [vmem:[%s0 + $0xf8] sm:$0xff]
  %v60 = vpack.c.bf16 %v29, %v28
  %v61 = vpack.c.bf16 %v31, %v30
  %v62 = vpack.c.bf16 %v33, %v32
  %v63 = vpack.c.bf16 %v35, %v34
  %v64 = vpack.c.bf16 %v37, %v36
  %v65 = vpack.c.bf16 %v39, %v38
  %v66 = vpack.c.bf16 %v41, %v40
  %v67 = vpack.c.bf16 %v43, %v42
  %v68 = vpack.c.bf16 %v45, %v44
  %v69 = vpack.c.bf16 %v47, %v46
  %v70 = vpack.c.bf16 %v49, %v48
  %v71 = vpack.c.bf16 %v51, %v50
  %v72 = vpack.c.bf16 %v53, %v52
  %v73 = vpack.c.bf16 %v55, %v54
  %v74 = vpack.c.bf16 %v57, %v56
  %v75 = vpack.c.bf16 %v59, %v58
  %v76 = vld [vmem:[%s1] sm:$0xf]
  %v77 = vld [vmem:[%s1 + $0x4] sm:$0xf]
  %v78 = vld [vmem:[%s1 + $0x8] sm:$0xf]
  %v79 = vld [vmem:[%s1 + $0xc] sm:$0xf]
  %v80 = vld [vmem:[%s1 + $0x10] sm:$0xf]
  %v81 = vld [vmem:[%s1 + $0x14] sm:$0xf]
  %v82 = vld [vmem:[%s1 + $0x18] sm:$0xf]
  %v83 = vld [vmem:[%s1 + $0x1c] sm:$0xf]
  %v84 = vld [vmem:[%s2] sm:$0xff]
  %v85 = vld [vmem:[%s2 + $0x8] sm:$0xff]
  %v86 = vld [vmem:[%s2 + $0x10] sm:$0xff]
  %v87 = vld [vmem:[%s2 + $0x18] sm:$0xff]
  %v88 = vld [vmem:[%s2 + $0x20] sm:$0xff]
  %v89 = vld [vmem:[%s2 + $0x28] sm:$0xff]
  %v90 = vld [vmem:[%s2 + $0x30] sm:$0xff]
  %v91 = vld [vmem:[%s2 + $0x38] sm:$0xff]
  %93 = vset.pattern.permute.xlu0 0
  %94 = vperm.xlu0 %93, %v84
  %v95 = vpop.permute.xlu0 %94
  %98 = vset.pattern.permute.xlu0 0
  %99 = vperm.xlu0 %98, %v85
  %v100 = vpop.permute.xlu0 %99
  %103 = vset.pattern.permute.xlu0 0
  %104 = vperm.xlu0 %103, %v86
  %v105 = vpop.permute.xlu0 %104
  %108 = vset.pattern.permute.xlu0 0
  %109 = vperm.xlu0 %108, %v87
  %v110 = vpop.permute.xlu0 %109
  %113 = vset.pattern.permute.xlu0 0
  %114 = vperm.xlu0 %113, %v88
  %v115 = vpop.permute.xlu0 %114
  %118 = vset.pattern.permute.xlu0 0
  %119 = vperm.xlu0 %118, %v89
  %v120 = vpop.permute.xlu0 %119
  %123 = vset.pattern.permute.xlu0 0
  %124 = vperm.xlu0 %123, %v90
  %v125 = vpop.permute.xlu0 %124
  %128 = vset.pattern.permute.xlu0 0
  %129 = vperm.xlu0 %128, %v91
  %v130 = vpop.permute.xlu0 %129
  %v140 = vunpack.c.l.b16 %v76
  %v141 = vunpack.c.l.b16 %v77
  %v142 = vunpack.c.l.b16 %v78
  %v143 = vunpack.c.l.b16 %v79
  %v144 = vunpack.c.l.b16 %v80
  %v145 = vunpack.c.l.b16 %v81
  %v146 = vunpack.c.l.b16 %v82
  %v147 = vunpack.c.l.b16 %v83
  %v148 = vpack.c.b16 %v141, %v140
  %v149 = vpack.c.b16 %v143, %v142
  %v150 = vpack.c.b16 %v145, %v144
  %v151 = vpack.c.b16 %v147, %v146
  %vm152 = vcmask 64512
  %v154 = vsel %vm152, %v148, 0
  %v157 = vsel %vm152, %v149, 0
  %v160 = vsel %vm152, %v150, 0
  %v163 = vsel %vm152, %v151, 0
  %v166 = vsel %vm152, %v60, 0
  %v169 = vsel %vm152, %v61, 0
  %v172 = vsel %vm152, %v62, 0
  %v175 = vsel %vm152, %v63, 0
  %v178 = vsel %vm152, %v64, 0
  %v181 = vsel %vm152, %v65, 0
  %v184 = vsel %vm152, %v66, 0
  %v187 = vsel %vm152, %v67, 0
  %v190 = vsel %vm152, %v68, 0
  %v193 = vsel %vm152, %v69, 0
  %v196 = vsel %vm152, %v70, 0
  %v199 = vsel %vm152, %v71, 0
  %v202 = vsel %vm152, %v72, 0
  %v205 = vsel %vm152, %v73, 0
  %v208 = vsel %vm152, %v74, 0
  %v211 = vsel %vm152, %v75, 0
  %213 = vmatprep.subr.bf16.mxu0 0
  %214 = vmatpush1.bf16.xpose.msra.mxu0 %v187
  %215 = vmatprep.subr.bf16.mxu0 0
  %216 = vmatpush1.bf16.xpose.msra.mxu0 %v184
  %217 = vmatprep.subr.bf16.mxu0 0
  %218 = vmatpush1.bf16.xpose.msra.mxu0 %v181
  %219 = vmatprep.subr.bf16.mxu0 0
  %220 = vmatpush1.bf16.xpose.msra.mxu0 %v178
  %221 = vmatprep.subr.bf16.mxu0 0
  %222 = vmatpush1.bf16.xpose.msra.mxu0 %v175
  %223 = vmatprep.subr.bf16.mxu0 0
  %224 = vmatpush1.bf16.xpose.msra.mxu0 %v172
  %225 = vmatprep.subr.bf16.mxu0 0
  %226 = vmatpush1.bf16.xpose.msra.mxu0 %v169
  %227 = vmatprep.subr.bf16.mxu0 0
  %228 = vmatpush1.bf16.xpose.msra.mxu0 %v166
  %229 = vmatprep.subr.bf16.mxu0 0
  %230 = vmatpush2.bf16.xpose.msra.mxu0 %v211
  %231 = vmatprep.subr.bf16.mxu0 0
  %232 = vmatpush2.bf16.xpose.msra.mxu0 %v208
  %233 = vmatprep.subr.bf16.mxu0 0
  %234 = vmatpush2.bf16.xpose.msra.mxu0 %v205
  %235 = vmatprep.subr.bf16.mxu0 0
  %236 = vmatpush2.bf16.xpose.msra.mxu0 %v202
  %237 = vmatprep.subr.bf16.mxu0 0
  %238 = vmatpush2.bf16.xpose.msra.mxu0 %v199
  %239 = vmatprep.subr.bf16.mxu0 0
  %240 = vmatpush2.bf16.xpose.msra.mxu0 %v196
  %241 = vmatprep.subr.bf16.mxu0 0
  %242 = vmatpush2.bf16.xpose.msra.mxu0 %v193
  %243 = vmatprep.subr.bf16.mxu0 0
  %244 = vmatpush2.bf16.xpose.msra.mxu0 %v190
  %245 = vmatprep.mubr.bf16.mxu0 0
  %246 = vmatmul.mubr.bf16.gmra.mxu0 %v154
  %v247 = vpop.f32.mrf.mxu0
  %v248 = vadd.f32 %v95, %v247
  %v249 = vpop.f32.mrf.mxu0
  %v250 = vadd.f32 %v95, %v249
  %v251 = vpop.f32.mrf.mxu0
  %v252 = vadd.f32 %v100, %v251
  %v253 = vpop.f32.mrf.mxu0
  %v254 = vadd.f32 %v100, %v253
  %255 = vmatprep.mubr.bf16.mxu0 0
  %256 = vmatmul.mubr.bf16.gmra.mxu0 %v157
  %v257 = vpop.f32.mrf.mxu0
  %v258 = vadd.f32 %v105, %v257
  %v259 = vpop.f32.mrf.mxu0
  %v260 = vadd.f32 %v105, %v259
  %v261 = vpop.f32.mrf.mxu0
  %v262 = vadd.f32 %v110, %v261
  %v263 = vpop.f32.mrf.mxu0
  %v264 = vadd.f32 %v110, %v263
  %265 = vmatprep.mubr.bf16.mxu0 0
  %266 = vmatmul.mubr.bf16.gmra.mxu0 %v160
  %v267 = vpop.f32.mrf.mxu0
  %v268 = vadd.f32 %v115, %v267
  %v269 = vpop.f32.mrf.mxu0
  %v270 = vadd.f32 %v115, %v269
  %v271 = vpop.f32.mrf.mxu0
  %v272 = vadd.f32 %v120, %v271
  %v273 = vpop.f32.mrf.mxu0
  %v274 = vadd.f32 %v120, %v273
  %275 = vmatprep.mubr.bf16.mxu0 0
  %276 = vmatmul.mubr.bf16.gmra.mxu0 %v163
  %v277 = vpop.f32.mrf.mxu0
  %v278 = vadd.f32 %v125, %v277
  %v279 = vpop.f32.mrf.mxu0
  %v280 = vadd.f32 %v125, %v279
  %v281 = vpop.f32.mrf.mxu0
  %v282 = vadd.f32 %v130, %v281
  %v283 = vpop.f32.mrf.mxu0
  %v284 = vadd.f32 %v130, %v283
  %285 = vdwg.mxu0
  %v286 = vmax.f32 %v248, 0.0
  %v287 = vmax.f32 %v250, 0.0
  %v288 = vmax.f32 %v252, 0.0
  %v289 = vmax.f32 %v254, 0.0
  %v290 = vmax.f32 %v258, 0.0
  %v291 = vmax.f32 %v260, 0.0
  %v292 = vmax.f32 %v262, 0.0
  %v293 = vmax.f32 %v264, 0.0
  %v294 = vmax.f32 %v268, 0.0
  %v295 = vmax.f32 %v270, 0.0
  %v296 = vmax.f32 %v272, 0.0
  %v297 = vmax.f32 %v274, 0.0
  %v298 = vmax.f32 %v278, 0.0
  %v299 = vmax.f32 %v280, 0.0
  %v300 = vmax.f32 %v282, 0.0
  %v301 = vmax.f32 %v284, 0.0
  %v302 = vld [vmem:[%s3] sm:$0xf]
  %v303 = vld [vmem:[%s3 + $0x4] sm:$0xf]
  %v304 = vld [vmem:[%s3 + $0x8] sm:$0xf]
  %v305 = vld [vmem:[%s3 + $0xc] sm:$0xf]
  %v306 = vpack.c.bf16 %v288, %v286
  %v307 = vpack.c.bf16 %v289, %v287
  %v308 = vpack.c.bf16 %v292, %v290
  %v309 = vpack.c.bf16 %v293, %v291
  %v310 = vpack.c.bf16 %v296, %v294
  %v311 = vpack.c.bf16 %v297, %v295
  %v312 = vpack.c.bf16 %v300, %v298
  %v313 = vpack.c.bf16 %v301, %v299
  %v314 = vld [vmem:[%s4] sm:$0xff]
  %v315 = vld [vmem:[%s4 + $0x8] sm:$0xff]
  %v316 = vld [vmem:[%s4 + $0x10] sm:$0xff]
  %v317 = vld [vmem:[%s4 + $0x18] sm:$0xff]
  %319 = vset.pattern.permute.xlu0 0
  %320 = vperm.xlu0 %319, %v314
  %v321 = vpop.permute.xlu0 %320
  %324 = vset.pattern.permute.xlu0 0
  %325 = vperm.xlu0 %324, %v315
  %v326 = vpop.permute.xlu0 %325
  %329 = vset.pattern.permute.xlu0 0
  %330 = vperm.xlu0 %329, %v316
  %v331 = vpop.permute.xlu0 %330
  %334 = vset.pattern.permute.xlu0 0
  %335 = vperm.xlu0 %334, %v317
  %v336 = vpop.permute.xlu0 %335
  %v342 = vunpack.c.l.b16 %v302
  %v343 = vunpack.c.l.b16 %v303
  %v344 = vunpack.c.l.b16 %v304
  %v345 = vunpack.c.l.b16 %v305
  %v346 = vpack.c.b16 %v343, %v342
  %v347 = vpack.c.b16 %v345, %v344
  %vm348 = vcmask 523264
  %v350 = vsel %vm348, %v346, 0
  %v353 = vsel %vm348, %v347, 0
  %355 = vmatprep.subr.bf16.mxu0 0
  %356 = vmatpush1.bf16.msra.mxu0 0
  %357 = vmatprep.subr.bf16.mxu0 0
  %358 = vmatpush1.bf16.msra.mxu0 0
  %359 = vmatprep.subr.bf16.mxu0 0
  %360 = vmatpush1.bf16.msra.mxu0 0
  %361 = vmatprep.subr.bf16.mxu0 0
  %362 = vmatpush1.bf16.msra.mxu0 0
  %363 = vmatprep.subr.bf16.mxu0 %v313
  %364 = vmatpush1.bf16.msra.mxu0 %v312
  %365 = vmatprep.subr.bf16.mxu0 %v311
  %366 = vmatpush1.bf16.msra.mxu0 %v310
  %367 = vmatprep.subr.bf16.mxu0 %v309
  %368 = vmatpush1.bf16.msra.mxu0 %v308
  %369 = vmatprep.subr.bf16.mxu0 %v307
  %370 = vmatpush1.bf16.msra.mxu0 %v306
  %371 = vmatprep.subr.bf16.mxu0 0
  %372 = vmatpush2.bf16.msra.mxu0 0
  %373 = vmatprep.subr.bf16.mxu0 0
  %374 = vmatpush2.bf16.msra.mxu0 0
  %375 = vmatprep.subr.bf16.mxu0 0
  %376 = vmatpush2.bf16.msra.mxu0 0
  %377 = vmatprep.subr.bf16.mxu0 0
  %378 = vmatpush2.bf16.msra.mxu0 0
  %379 = vmatprep.subr.bf16.mxu0 0
  %380 = vmatpush2.bf16.msra.mxu0 0
  %381 = vmatprep.subr.bf16.mxu0 0
  %382 = vmatpush2.bf16.msra.mxu0 0
  %383 = vmatprep.subr.bf16.mxu0 0
  %384 = vmatpush2.bf16.msra.mxu0 0
  %385 = vmatprep.subr.bf16.mxu0 0
  %386 = vmatpush2.bf16.msra.mxu0 0
  %387 = vmatprep.mubr.bf16.mxu0 0
  %388 = vmatmul.mubr.bf16.gmra.mxu0 %v350
  %v389 = vpop.f32.mrf.mxu0
  %v390 = vadd.f32 %v321, %v389
  %v391 = vpop.f32.mrf.mxu0
  %v392 = vadd.f32 %v321, %v391
  %v393 = vpop.f32.mrf.mxu0
  %v394 = vadd.f32 %v326, %v393
  %v395 = vpop.f32.mrf.mxu0
  %v396 = vadd.f32 %v326, %v395
  %397 = vmatprep.mubr.bf16.mxu0 0
  %398 = vmatmul.mubr.bf16.gmra.mxu0 %v353
  %v399 = vpop.f32.mrf.mxu0
  %v400 = vadd.f32 %v331, %v399
  %v401 = vpop.f32.mrf.mxu0
  %v402 = vadd.f32 %v331, %v401
  %v403 = vpop.f32.mrf.mxu0
  %v404 = vadd.f32 %v336, %v403
  %v405 = vpop.f32.mrf.mxu0
  %v406 = vadd.f32 %v336, %v405
  %407 = vdwg.mxu0
  %v408 = vmax.f32 %v390, 0.0
  %v409 = vmax.f32 %v392, 0.0
  %v410 = vmax.f32 %v394, 0.0
  %v411 = vmax.f32 %v396, 0.0
  %v412 = vmax.f32 %v400, 0.0
  %v413 = vmax.f32 %v402, 0.0
  %v414 = vmax.f32 %v404, 0.0
  %v415 = vmax.f32 %v406, 0.0
  %v416 = vld [vmem:[%s5] sm:$0xff]
  %v417 = vld [vmem:[%s5 + $0x8] sm:$0xff]
  %v418 = vld [vmem:[%s5 + $0x10] sm:$0xff]
  %v419 = vld [vmem:[%s5 + $0x18] sm:$0xff]
  %421 = vset.pattern.permute.xlu0 0
  %422 = vperm.xlu0 %421, %v416
  %v423 = vpop.permute.xlu0 %422
  %426 = vset.pattern.permute.xlu0 0
  %427 = vperm.xlu0 %426, %v417
  %v428 = vpop.permute.xlu0 %427
  %431 = vset.pattern.permute.xlu0 0
  %432 = vperm.xlu0 %431, %v418
  %v433 = vpop.permute.xlu0 %432
  %436 = vset.pattern.permute.xlu0 0
  %437 = vperm.xlu0 %436, %v419
  %v438 = vpop.permute.xlu0 %437
  %v440 = vmul.f32 %v408, %v423
  %v441 = vmul.f32 %v409, %v423
  %v442 = vmul.f32 %v410, %v428
  %v443 = vmul.f32 %v411, %v428
  %v444 = vmul.f32 %v412, %v433
  %v445 = vmul.f32 %v413, %v433
  %v446 = vmul.f32 %v414, %v438
  %v447 = vmul.f32 %v415, %v438
  %v448 = vadd.f32 %v440, %v442
  %v449 = vadd.f32 %v448, %v444
  %v450 = vadd.f32 %v449, %v446
  %v451 = vrot.slane %v450, 4
  %v452 = vadd.f32 %v450, %v451
  %v453 = vrot.slane %v452, 2
  %v454 = vadd.f32 %v452, %v453
  %v455 = vrot.slane %v454, 1
  %v456 = vadd.f32 %v454, %v455
  %v457 = vadd.f32 %v441, %v443
  %v458 = vadd.f32 %v457, %v445
  %v459 = vadd.f32 %v458, %v447
  %v460 = vrot.slane %v459, 4
  %v461 = vadd.f32 %v459, %v460
  %v462 = vrot.slane %v461, 2
  %v463 = vadd.f32 %v461, %v462
  %v464 = vrot.slane %v463, 1
  %v465 = vadd.f32 %v463, %v464
  %s466 = sld [smem:[#allocation2]]
  %v467 = vstv %s466
  %v468 = vadd.f32 %v456, %v467
  %v469 = vadd.f32 %v465, %v467
  %v472 = vcombine.low %v468, %v469
  %v474 = vunpack.c.l.s4 1966171168
  %v475 = vunpack.c.0.s8 %v474
  %v476 = vlaneseq
  %v477 = vshrl.u32 %v476, 7
  %v478 = vsub.s32 %v475, %v477
  %v479 = vrot.slane %v472, %v478
  %v481 = vunpack.c.l.s4 1966171168
  %v482 = vunpack.c.0.s8 %v481
  %v483 = vlaneseq
  %v484 = vshrl.u32 %v483, 7
  %v485 = vsub.s32 %v482, %v484
  %v486 = vrot.slane %v479, %v485
  %v488 = vlaneseq
  %vm489 = vcmp.ge.s32.totalorder %v488, 0
  %vm490 = vcmp.lt.s32.totalorder %v488, 256
  %vm491 = vmand %vm489, %vm490
  %492 = vst.msk [vmem:[%s7] sm:$0x3] %vm491, %v486
  // Predicated region
  $region30: #{mlp_forward.1} parent=0 // pred_check
    _
  $region31: #{mlp_forward.1} parent=0 // pred_check_branch
    %494 = sbr.rel (0) target = $region33
  $region32: #{mlp_forward.1} parent=0 // pred_region
    _
  $region33: #{mlp_forward.1} parent=0 // pred_fallthru
    _
  // Predicated region
  $region34: #{mlp_forward.1} parent=0 // pred_check
    _
  $region35: #{mlp_forward.1} parent=0 // pred_check_branch
    %496 = sbr.rel (0) target = $region37
  $region36: #{mlp_forward.1} parent=0 // pred_region
    _
  $region37: #{mlp_forward.1} parent=0 // pred_fallthru
    _

</llo_original>
